<compile_context>
chip_gen: v7x
topology: tpu7x:2x2x1
jax: 0.10.0
libtpu: 0.0.40
codegen_flags: <defaults>
</compile_context>

<pallas_src>
import functools

import jax
import jax.numpy as jnp
from jax.experimental import pallas as pl
from jax.experimental.pallas import tpu as pltpu


HIDDEN_SIZE = 128
INTERMEDIATE_SIZE = 256
RMS_NORM_EPS = 1e-6
FFN_BIAS = False  # config['ffn_bias'] = False (Llama-style, bias-free projections)
# TODO(synk): ffn_bias=True variant (bias add after each projection) omitted;
#             the reference config uses ffn_bias=False.

_ROW_ALIGN = 16  # bf16 packs 2 rows per sublane -> keep row tiles multiples of 16


def _round_up(a, b):
    return ((a + b - 1) // b) * b


def _ffn_kernel(x_ref, wgu_ref, wd_ref, o_ref, *, inter_size, eps):
    """One row-tile: RMSNorm -> fused gate|up matmul -> SiLU*up -> down matmul."""
    # --- RMSNorm in float32 (matches the PyTorch module); the norm scale is
    #     already folded into wgu at parameter-prep time. ---
    x = x_ref[...].astype(jnp.float32)                          # (tm, H)
    var = jnp.mean(x * x, axis=-1, keepdims=True)               # (tm, 1)
    xn = (x * jax.lax.rsqrt(var + eps)).astype(wgu_ref.dtype)   # (tm, H) bf16 operand

    # --- fused gate/up projection: one (tm,H) @ (H,2I) MXU matmul, f32 acc ---
    gu = jnp.dot(xn, wgu_ref[...], preferred_element_type=jnp.float32)  # (tm, 2I)
    gate = gu[:, :inter_size]                                   # lane-aligned static slice
    up = gu[:, inter_size:]

    # --- SiLU(gate) * up: sigmoid on EUP, multiplies on VPU (free filler slots) ---
    h = ((gate * jax.nn.sigmoid(gate)) * up).astype(wd_ref.dtype)        # (tm, I) bf16

    # --- down projection ---
    out = jnp.dot(h, wd_ref[...], preferred_element_type=jnp.float32)    # (tm, H)
    o_ref[...] = out.astype(o_ref.dtype)


def prepare_ffn_params(norm_weight, w_gate, w_up, w_down, *,
                       matmul_dtype=jnp.bfloat16):
    """One-time parameter prep (do this at load time, NOT per forward call):
      * fuse gate|up into a single (H, 2I) weight -> one MXU pass per tile,
      * fold the RMSNorm scale into that fused weight (removes a per-tile
        VPU multiply and one input stream from the kernel),
      * cast both weights to the MXU operand dtype (bf16 => native-rate MXU
        with f32 accumulation on v5e/v6e/v7x).
    Weights are (in_features, out_features), i.e. transposed nn.Linear.weight."""
    w_gu = jnp.concatenate([w_gate, w_up], axis=1).astype(jnp.float32)
    w_gu = norm_weight.astype(jnp.float32)[:, None] * w_gu
    return w_gu.astype(matmul_dtype), w_down.astype(matmul_dtype)


def llama4_ffn(hidden_states, w_gu, w_down, *, tm=1024, min_grid_steps=2,
               vmem_limit_bytes=None):
    """hidden_states: (B, S, H). w_gu: (H, 2I) fused, norm-scale-folded gate|up
    weight; w_down: (I, H); both from prepare_ffn_params. Output dtype follows
    hidden_states."""
    B, S, H = hidden_states.shape
    two_i = w_gu.shape[1]
    inter_size = two_i // 2
    rows = B * S

    # Row tile: as large as possible (amortize ~0.35us/step overhead), clamped
    # to the problem size, 16-row aligned (bf16 sublane packing), and capped so
    # the parallel grid keeps >= min_grid_steps steps when rows allow it
    # (v7x has 2 TensorCores; a single-step grid would idle one of them).
    tm_eff = min(tm, _round_up(rows, _ROW_ALIGN))
    if rows > _ROW_ALIGN * (min_grid_steps - 1):
        cap = _round_up(pl.cdiv(rows, min_grid_steps), _ROW_ALIGN)
        tm_eff = max(_ROW_ALIGN, min(tm_eff, cap))
    grid = (pl.cdiv(rows, tm_eff),)  # partial edge block handled by Pallas

    x2d = hidden_states.reshape(rows, H)  # row-major flatten, no data movement

    compiler_kwargs = dict(dimension_semantics=("parallel",))
    if vmem_limit_bytes is not None:
        compiler_kwargs["vmem_limit_bytes"] = vmem_limit_bytes

    out = pl.pallas_call(
        functools.partial(_ffn_kernel, inter_size=inter_size, eps=RMS_NORM_EPS),
        out_shape=jax.ShapeDtypeStruct((rows, H), hidden_states.dtype),
        grid_spec=pltpu.PrefetchScalarGridSpec(
            num_scalar_prefetch=0,
            grid=grid,
            in_specs=[
                pl.BlockSpec((tm_eff, H), lambda i: (i, 0)),       # activation rows
                pl.BlockSpec((H, two_i), lambda i: (0, 0)),        # fused gate|up weight
                pl.BlockSpec((inter_size, H), lambda i: (0, 0)),   # down weight (in, out)
            ],
            out_specs=pl.BlockSpec((tm_eff, H), lambda i: (i, 0)),
        ),
        compiler_params=pltpu.CompilerParams(**compiler_kwargs),
    )(x2d, w_gu, w_down)

    return out.reshape(B, S, H)


def _reference_f32(hidden_states, norm_weight, w_gate, w_up, w_down):
    """Full-f32 mirror of the PyTorch module."""
    x = hidden_states.astype(jnp.float32)
    var = jnp.mean(x * x, axis=-1, keepdims=True)
    xn = norm_weight.astype(jnp.float32) * (x * jax.lax.rsqrt(var + RMS_NORM_EPS))
    hi = jax.lax.Precision.HIGHEST
    gate = jnp.dot(xn, w_gate.astype(jnp.float32), precision=hi)
    up = jnp.dot(xn, w_up.astype(jnp.float32), precision=hi)
    h = jax.nn.silu(gate) * up
    return jnp.dot(h, w_down.astype(jnp.float32), precision=hi).astype(hidden_states.dtype)


def _reference_mirror(hidden_states, w_gu, w_down, inter_size):
    """Same fused weights / operand dtypes as the kernel (tight-tolerance check)."""
    x = hidden_states.astype(jnp.float32)
    var = jnp.mean(x * x, axis=-1, keepdims=True)
    xn = (x * jax.lax.rsqrt(var + RMS_NORM_EPS)).astype(w_gu.dtype)
    gu = jnp.dot(xn, w_gu, preferred_element_type=jnp.float32)
    gate, up = gu[..., :inter_size], gu[..., inter_size:]
    h = ((gate * jax.nn.sigmoid(gate)) * up).astype(w_down.dtype)
    out = jnp.dot(h, w_down, preferred_element_type=jnp.float32)
    return out.astype(hidden_states.dtype)


if __name__ == "__main__":
    key = jax.random.PRNGKey(0)
    k_x, k_g, k_u, k_d, k_x2 = jax.random.split(key, 5)

    H, I = HIDDEN_SIZE, INTERMEDIATE_SIZE

    # Deterministic params (module: Linear(H->I), Linear(H->I), Linear(I->H)).
    # PyTorch nn.Linear weight is (out, in); we store the transpose (in, out).
    norm_weight = jnp.ones((H,), dtype=jnp.float32)
    w_gate = jax.random.normal(k_g, (H, I), dtype=jnp.float32) * 0.02
    w_up = jax.random.normal(k_u, (H, I), dtype=jnp.float32) * 0.02
    w_down = jax.random.normal(k_d, (I, H), dtype=jnp.float32) * 0.02

    # One-time weight prep: fused gate|up, folded norm scale, bf16 MXU operands.
    w_gu_p, w_down_p = prepare_ffn_params(norm_weight, w_gate, w_up, w_down)

    # --- small check at the module's natural shapes (B=2, S=8, H=128) ---
    B, S = 2, 8
    x = jax.random.normal(k_x, (B, S, H), dtype=jnp.float32)
    out = jax.block_until_ready(llama4_ffn(x, w_gu_p, w_down_p))
    assert out.shape == (B, S, H) and out.dtype == x.dtype
    mir = _reference_mirror(x, w_gu_p, w_down_p, I)
    ref = _reference_f32(x, norm_weight, w_gate, w_up, w_down)
    assert jnp.allclose(out, mir, atol=5e-4, rtol=5e-3), "mismatch vs bf16 mirror (small)"
    assert jnp.allclose(out, ref, atol=3e-3, rtol=5e-2), "mismatch vs f32 reference (small)"

    # --- multi-step grid + partial edge block: rows=510 -> tm_eff=256, grid=2 ---
    B2, S2 = 3, 170
    x2 = jax.random.normal(k_x2, (B2, S2, H), dtype=jnp.float32)
    out2 = jax.block_until_ready(llama4_ffn(x2, w_gu_p, w_down_p))
    assert out2.shape == (B2, S2, H)
    mir2 = _reference_mirror(x2, w_gu_p, w_down_p, I)
    ref2 = _reference_f32(x2, norm_weight, w_gate, w_up, w_down)
    assert jnp.allclose(out2, mir2, atol=5e-4, rtol=5e-3), "mismatch vs bf16 mirror (tiled)"
    assert jnp.allclose(out2, ref2, atol=3e-3, rtol=5e-2), "mismatch vs f32 reference (tiled)"

    print("KERNEL_OK")
</pallas_src>

<mosaic_0001>
module attributes {stable_mosaic.version = 11 : i64} {
  func.func @_ffn_kernel(%arg0: i32, %arg1: memref<16x128xf32, #tpu.memory_space<vmem>>, %arg2: memref<128x512xbf16, #tpu.memory_space<vmem>>, %arg3: memref<256x128xbf16, #tpu.memory_space<vmem>>, %arg4: memref<16x128xf32, #tpu.memory_space<vmem>>) attributes {dimension_semantics = [#tpu.dimension_semantics<parallel>], iteration_bounds = array<i64: 1>, scalar_prefetch = 0 : i64, scratch_operands = 0 : i64, tpu.core_type = #tpu.core_type<tc>, window_params = [{transform_indices = @transform_0, window_bounds = array<i64: 16, 128>}, {pipeline_mode = #tpu.pipeline_mode<synchronous>, transform_indices = @transform_1, window_bounds = array<i64: 128, 512>}, {pipeline_mode = #tpu.pipeline_mode<synchronous>, transform_indices = @transform_2, window_bounds = array<i64: 256, 128>}, {transform_indices = @transform_3, window_bounds = array<i64: 16, 128>}]} {
    %c0 = arith.constant 0 : index
    %c0_0 = arith.constant 0 : index
    %0 = vector.load %arg1[%c0, %c0_0] : memref<16x128xf32, #tpu.memory_space<vmem>>, vector<16x128xf32>
    %1 = arith.mulf %0, %0 : vector<16x128xf32>
    %cst = arith.constant dense<0.000000e+00> : vector<16xf32>
    %2 = vector.multi_reduction <add>, %1, %cst [1] : vector<16x128xf32> to vector<16xf32>
    %3 = vector.shape_cast %2 : vector<16xf32> to vector<16x1xf32>
    %cst_1 = arith.constant 1.280000e+02 : f32
    %4 = vector.broadcast %cst_1 : f32 to vector<16x1xf32>
    %5 = arith.divf %3, %4 : vector<16x1xf32>
    %cst_2 = arith.constant 9.99999997E-7 : f32
    %6 = vector.broadcast %cst_2 : f32 to vector<16x1xf32>
    %7 = arith.addf %5, %6 : vector<16x1xf32>
    %8 = math.rsqrt %7 : vector<16x1xf32>
    %9 = vector.broadcast %8 : vector<16x1xf32> to vector<16x128xf32>
    %10 = arith.mulf %0, %9 : vector<16x128xf32>
    %11 = arith.truncf %10 : vector<16x128xf32> to vector<16x128xbf16>
    %c0_3 = arith.constant 0 : index
    %c0_4 = arith.constant 0 : index
    %12 = vector.load %arg2[%c0_3, %c0_4] : memref<128x512xbf16, #tpu.memory_space<vmem>>, vector<128x512xbf16>
    %cst_5 = arith.constant dense<0.000000e+00> : vector<16x512xf32>
    %13 = tpu.matmul %11, %12, %cst_5 {dimension_numbers = #tpu.dot_dimension_numbers<[1], [0], [0], [1], [0, 0, 1, 1], [], []>} : vector<16x128xbf16>, vector<128x512xbf16>, vector<16x512xf32> -> vector<16x512xf32>
    %14 = vector.extract_strided_slice %13 {offsets = [0, 0], sizes = [16, 256], strides = [1, 1]} : vector<16x512xf32> to vector<16x256xf32>
    %15 = vector.extract_strided_slice %13 {offsets = [0, 256], sizes = [16, 256], strides = [1, 1]} : vector<16x512xf32> to vector<16x256xf32>
    %16 = arith.negf %14 : vector<16x256xf32>
    %17 = math.exp %16 : vector<16x256xf32>
    %cst_6 = arith.constant 1.000000e+00 : f32
    %18 = vector.broadcast %cst_6 : f32 to vector<16x256xf32>
    %19 = arith.addf %18, %17 : vector<16x256xf32>
    %20 = arith.divf %18, %19 : vector<16x256xf32>
    %21 = arith.mulf %14, %20 : vector<16x256xf32>
    %22 = arith.mulf %21, %15 : vector<16x256xf32>
    %23 = arith.truncf %22 : vector<16x256xf32> to vector<16x256xbf16>
    %c0_7 = arith.constant 0 : index
    %c0_8 = arith.constant 0 : index
    %24 = vector.load %arg3[%c0_7, %c0_8] : memref<256x128xbf16, #tpu.memory_space<vmem>>, vector<256x128xbf16>
    %cst_9 = arith.constant dense<0.000000e+00> : vector<16x128xf32>
    %25 = tpu.matmul %23, %24, %cst_9 {dimension_numbers = #tpu.dot_dimension_numbers<[1], [0], [0], [1], [0, 0, 1, 1], [], []>} : vector<16x256xbf16>, vector<256x128xbf16>, vector<16x128xf32> -> vector<16x128xf32>
    %c0_10 = arith.constant 0 : index
    %c0_11 = arith.constant 0 : index
    %26 = vector.load %arg4[%c0_10, %c0_11] : memref<16x128xf32, #tpu.memory_space<vmem>>, vector<16x128xf32>
    tpu.vector_store %arg4[%c0_10, %c0_11], %25 {strides = array<i32>} : memref<16x128xf32, #tpu.memory_space<vmem>>, vector<16x128xf32>,
    return
  }
  func.func @transform_0(%arg0: i32) -> (i32, i32) {
    %c0_i32 = arith.constant 0 : i32
    %c0_i32_0 = arith.constant 0 : i32
    return %arg0, %c0_i32 : i32, i32
  }
  func.func @transform_1(%arg0: i32) -> (i32, i32) {
    %c0_i32 = arith.constant 0 : i32
    %c0_i32_0 = arith.constant 0 : i32
    %c0_i32_1 = arith.constant 0 : i32
    return %c0_i32, %c0_i32_0 : i32, i32
  }
  func.func @transform_2(%arg0: i32) -> (i32, i32) {
    %c0_i32 = arith.constant 0 : i32
    %c0_i32_0 = arith.constant 0 : i32
    %c0_i32_1 = arith.constant 0 : i32
    return %c0_i32, %c0_i32_0 : i32, i32
  }
  func.func @transform_3(%arg0: i32) -> (i32, i32) {
    %c0_i32 = arith.constant 0 : i32
    %c0_i32_0 = arith.constant 0 : i32
    return %arg0, %c0_i32 : i32, i32
  }
}

</mosaic_0001>

<llo_original>
// kernel: tpu_custom_call.1
$region0: #{tpu_custom_call.1}
  #allocation0 [shape = 'u32[]', space=smem, size = 0x4, offset = 0x4, fixed_abs, tag = 'smem constant byte address 0x4 - core index']
  #allocation1 [shape = 'u32[144,128]{1,0:T(1,128)}', space=vmem, size = 0x12000, scoped, tag = 'internal scratch']
  %s0 = inlined_call_operand.hbm [shape: f32[16,128], index: 0, kind: input, shape index: {}]
  %s1 = inlined_call_operand.hbm [shape: bf16[128,512], index: 1, kind: input, shape index: {}]
  %s2 = inlined_call_operand.hbm [shape: bf16[256,128], index: 2, kind: input, shape index: {}]
  %s3 = inlined_call_operand.hbm [shape: f32[16,128], index: 3, kind: output, shape index: {}]
  %s4 = sld [smem:[#allocation0]]
  $region34: #{tpu_custom_call.1} parent=0
    _
  %s6 = ssub.s32 1, %s4
  %s7 = scalar_select 0, %s6, %s4
  $region1: #{tpu_custom_call.1} parent=0
    #allocation2 [shape = 'u8[8192]{0}', space=vmem, size = 0x2000, scoped, tag = 'input window, operand 0, single buffered']
    #allocation3 [shape = 's32[1]{0}', space=sflag, size = 0x4, scoped, tag = 'scoped memory for tpu_custom_call.1']
    #allocation4 [shape = 's32[1]{0}', space=sflag, size = 0x4, scoped, tag = 'scoped memory for tpu_custom_call.1']
    #allocation5 [shape = 'u8[131072]{0}', space=vmem, size = 0x20000, scoped, tag = 'input window, operand 1, single buffered']
    #allocation6 [shape = 's32[1]{0}', space=sflag, size = 0x4, scoped, tag = 'scoped memory for tpu_custom_call.1']
    #allocation7 [shape = 'u8[65536]{0}', space=vmem, size = 0x10000, scoped, tag = 'input window, operand 2, single buffered']
    #allocation8 [shape = 'u8[8192]{0}', space=vmem, size = 0x2000, scoped, tag = 'output window, operand 0, single buffered']
    %8 = vsyncpa [#allocation3], 0
    %9 = vsyncpa [#allocation6], 0
    %10 = vsyncpa [#allocation4], 0
    // Predicated region
    $region2: #{tpu_custom_call.1} parent=1 // pred_check
      _
    $region3: #{tpu_custom_call.1} parent=1 // pred_check_branch
      %12 = sbr.rel (0) target = $region5
    $region4: #{tpu_custom_call.1} parent=1 // pred_region
      %s14 = ssub.s32 256, 256
      %15 = vsyncadd [#allocation3], %s14
      %s16 = sshll.u32 [#allocation2], 4
      %s17 = int_to_ptr.vmem [resolvable:$true] %s16
      %22 = dma.hbm_to_vmem [thread:$0]  %s0, 256, %s17, [#allocation3], 128, 128, 8
    $region5: #{tpu_custom_call.1} parent=1 // pred_fallthru
      _
    // Predicated region
    $region6: #{tpu_custom_call.1} parent=1 // pred_check
      _
    $region7: #{tpu_custom_call.1} parent=1 // pred_check_branch
      %24 = sbr.rel (0) target = $region9
    $region8: #{tpu_custom_call.1} parent=1 // pred_region
      %s26 = ssub.s32 4096, 4096
      %27 = vsyncadd [#allocation6], %s26
      %s28 = sshll.u32 [#allocation5], 4
      %s29 = int_to_ptr.vmem [resolvable:$true] %s28
      %34 = dma.hbm_to_vmem [thread:$0]  %s1, 4096, %s29, [#allocation6], 256, 256, 16
    $region9: #{tpu_custom_call.1} parent=1 // pred_fallthru
      _
    // Predicated region
    $region10: #{tpu_custom_call.1} parent=1 // pred_check
      _
    $region11: #{tpu_custom_call.1} parent=1 // pred_check_branch
      %36 = sbr.rel (0) target = $region13
    $region12: #{tpu_custom_call.1} parent=1 // pred_region
      %s38 = ssub.s32 2048, 2048
      %39 = vsyncadd [#allocation6], %s38
      %s40 = sshll.u32 [#allocation7], 4
      %s41 = int_to_ptr.vmem [resolvable:$true] %s40
      %46 = dma.hbm_to_vmem [thread:$0]  %s2, 2048, %s41, [#allocation6], 64, 64, 4
    $region13: #{tpu_custom_call.1} parent=1 // pred_fallthru
      _
    // Predicated region
    $region14: #{tpu_custom_call.1} parent=1 // pred_check
      _
    $region15: #{tpu_custom_call.1} parent=1 // pred_check_branch
      %48 = sbr.rel (0) target = $region17
    $region16: #{tpu_custom_call.1} parent=1 // pred_region
      %49 = dma.done [#allocation3], 256
    $region17: #{tpu_custom_call.1} parent=1 // pred_fallthru
      _
    // Predicated region
    $region18: #{tpu_custom_call.1} parent=1 // pred_check
      _
    $region19: #{tpu_custom_call.1} parent=1 // pred_check_branch
      %51 = sbr.rel (0) target = $region21
    $region20: #{tpu_custom_call.1} parent=1 // pred_region
      %52 = dma.done [#allocation6], 4096
    $region21: #{tpu_custom_call.1} parent=1 // pred_fallthru
      _
    // Predicated region
    $region22: #{tpu_custom_call.1} parent=1 // pred_check
      _
    $region23: #{tpu_custom_call.1} parent=1 // pred_check_branch
      %54 = sbr.rel (0) target = $region25
    $region24: #{tpu_custom_call.1} parent=1 // pred_region
      %55 = dma.done [#allocation6], 2048
    $region25: #{tpu_custom_call.1} parent=1 // pred_fallthru
      _
    %v57 = vld [vmem:[#allocation2] sm:$0xff]
    %v58 = vld [vmem:[#allocation2 + $0x8] sm:$0xff]
    %v59 = vmul.f32 %v57, %v57
    %v60 = vmul.f32 %v58, %v58
    %61 = vadd.xlane.f32.xlu0 %v59
    %v62 = vpop.xlane.xlu0 %61
    %63 = vadd.xlane.f32.xlu0 %v60
    %v64 = vpop.xlane.xlu0 %63
    %v65 = vrcp.pop 128.0
    %v66 = vmul.f32 %v62, %v65
    %v67 = vmul.f32 %v64, %v65
    %v68 = vadd.f32 %v66, 1e-06
    %v69 = vadd.f32 %v67, 1e-06
    %v70 = vrsqrt.pop %v68
    %v71 = vrsqrt.pop %v69
    %v72 = vmul.f32 %v57, %v70
    %v73 = vmul.f32 %v58, %v71
    %v74 = vpack.c.bf16 %v73, %v72
    %v75 = vld [vmem:[#allocation5] sm:$0xff]
    %v76 = vld [vmem:[#allocation5 + $0x8] sm:$0xff]
    %v77 = vld [vmem:[#allocation5 + $0x10] sm:$0xff]
    %v78 = vld [vmem:[#allocation5 + $0x18] sm:$0xff]
    %v79 = vld [vmem:[#allocation5 + $0x20] sm:$0xff]
    %v80 = vld [vmem:[#allocation5 + $0x28] sm:$0xff]
    %v81 = vld [vmem:[#allocation5 + $0x30] sm:$0xff]
    %v82 = vld [vmem:[#allocation5 + $0x38] sm:$0xff]
    %v83 = vld [vmem:[#allocation5 + $0x40] sm:$0xff]
    %v84 = vld [vmem:[#allocation5 + $0x48] sm:$0xff]
    %v85 = vld [vmem:[#allocation5 + $0x50] sm:$0xff]
    %v86 = vld [vmem:[#allocation5 + $0x58] sm:$0xff]
    %v87 = vld [vmem:[#allocation5 + $0x60] sm:$0xff]
    %v88 = vld [vmem:[#allocation5 + $0x68] sm:$0xff]
    %v89 = vld [vmem:[#allocation5 + $0x70] sm:$0xff]
    %v90 = vld [vmem:[#allocation5 + $0x78] sm:$0xff]
    %v91 = vld [vmem:[#allocation5 + $0x80] sm:$0xff]
    %v92 = vld [vmem:[#allocation5 + $0x88] sm:$0xff]
    %v93 = vld [vmem:[#allocation5 + $0x90] sm:$0xff]
    %v94 = vld [vmem:[#allocation5 + $0x98] sm:$0xff]
    %v95 = vld [vmem:[#allocation5 + $0xa0] sm:$0xff]
    %v96 = vld [vmem:[#allocation5 + $0xa8] sm:$0xff]
    %v97 = vld [vmem:[#allocation5 + $0xb0] sm:$0xff]
    %v98 = vld [vmem:[#allocation5 + $0xb8] sm:$0xff]
    %v99 = vld [vmem:[#allocation5 + $0xc0] sm:$0xff]
    %v100 = vld [vmem:[#allocation5 + $0xc8] sm:$0xff]
    %v101 = vld [vmem:[#allocation5 + $0xd0] sm:$0xff]
    %v102 = vld [vmem:[#allocation5 + $0xd8] sm:$0xff]
    %v103 = vld [vmem:[#allocation5 + $0xe0] sm:$0xff]
    %v104 = vld [vmem:[#allocation5 + $0xe8] sm:$0xff]
    %v105 = vld [vmem:[#allocation5 + $0xf0] sm:$0xff]
    %v106 = vld [vmem:[#allocation5 + $0xf8] sm:$0xff]
    %v139 = vunpack.c.l.b16 %v75
    %v140 = vunpack.c.h.b16 %v75
    %v141 = vunpack.c.l.b16 %v76
    %v142 = vunpack.c.h.b16 %v76
    %v143 = vunpack.c.l.b16 %v77
    %v144 = vunpack.c.h.b16 %v77
    %v145 = vunpack.c.l.b16 %v78
    %v146 = vunpack.c.h.b16 %v78
    %v147 = vunpack.c.l.b16 %v79
    %v148 = vunpack.c.h.b16 %v79
    %v149 = vunpack.c.l.b16 %v80
    %v150 = vunpack.c.h.b16 %v80
    %v151 = vunpack.c.l.b16 %v81
    %v152 = vunpack.c.h.b16 %v81
    %v153 = vunpack.c.l.b16 %v82
    %v154 = vunpack.c.h.b16 %v82
    %v155 = vunpack.c.l.b16 %v83
    %v156 = vunpack.c.h.b16 %v83
    %v157 = vunpack.c.l.b16 %v84
    %v158 = vunpack.c.h.b16 %v84
    %v159 = vunpack.c.l.b16 %v85
    %v160 = vunpack.c.h.b16 %v85
    %v161 = vunpack.c.l.b16 %v86
    %v162 = vunpack.c.h.b16 %v86
    %v163 = vunpack.c.l.b16 %v87
    %v164 = vunpack.c.h.b16 %v87
    %v165 = vunpack.c.l.b16 %v88
    %v166 = vunpack.c.h.b16 %v88
    %v167 = vunpack.c.l.b16 %v89
    %v168 = vunpack.c.h.b16 %v89
    %v169 = vunpack.c.l.b16 %v90
    %v170 = vunpack.c.h.b16 %v90
    %v171 = vunpack.c.l.b16 %v91
    %v172 = vunpack.c.h.b16 %v91
    %v173 = vunpack.c.l.b16 %v92
    %v174 = vunpack.c.h.b16 %v92
    %v175 = vunpack.c.l.b16 %v93
    %v176 = vunpack.c.h.b16 %v93
    %v177 = vunpack.c.l.b16 %v94
    %v178 = vunpack.c.h.b16 %v94
    %v179 = vunpack.c.l.b16 %v95
    %v180 = vunpack.c.h.b16 %v95
    %v181 = vunpack.c.l.b16 %v96
    %v182 = vunpack.c.h.b16 %v96
    %v183 = vunpack.c.l.b16 %v97
    %v184 = vunpack.c.h.b16 %v97
    %v185 = vunpack.c.l.b16 %v98
    %v186 = vunpack.c.h.b16 %v98
    %v187 = vunpack.c.l.b16 %v99
    %v188 = vunpack.c.h.b16 %v99
    %v189 = vunpack.c.l.b16 %v100
    %v190 = vunpack.c.h.b16 %v100
    %v191 = vunpack.c.l.b16 %v101
    %v192 = vunpack.c.h.b16 %v101
    %v193 = vunpack.c.l.b16 %v102
    %v194 = vunpack.c.h.b16 %v102
    %v195 = vunpack.c.l.b16 %v103
    %v196 = vunpack.c.h.b16 %v103
    %v197 = vunpack.c.l.b16 %v104
    %v198 = vunpack.c.h.b16 %v104
    %v199 = vunpack.c.l.b16 %v105
    %v200 = vunpack.c.h.b16 %v105
    %v201 = vunpack.c.l.b16 %v106
    %v202 = vunpack.c.h.b16 %v106
    %v203 = vpack.c.b16 %v143, %v139
    %v204 = vpack.c.b16 %v144, %v140
    %v205 = vpack.c.b16 %v145, %v141
    %v206 = vpack.c.b16 %v146, %v142
    %v207 = vpack.c.b16 %v151, %v147
    %v208 = vpack.c.b16 %v152, %v148
    %v209 = vpack.c.b16 %v153, %v149
    %v210 = vpack.c.b16 %v154, %v150
    %v211 = vpack.c.b16 %v159, %v155
    %v212 = vpack.c.b16 %v160, %v156
    %v213 = vpack.c.b16 %v161, %v157
    %v214 = vpack.c.b16 %v162, %v158
    %v215 = vpack.c.b16 %v167, %v163
    %v216 = vpack.c.b16 %v168, %v164
    %v217 = vpack.c.b16 %v169, %v165
    %v218 = vpack.c.b16 %v170, %v166
    %v219 = vpack.c.b16 %v175, %v171
    %v220 = vpack.c.b16 %v176, %v172
    %v221 = vpack.c.b16 %v177, %v173
    %v222 = vpack.c.b16 %v178, %v174
    %v223 = vpack.c.b16 %v183, %v179
    %v224 = vpack.c.b16 %v184, %v180
    %v225 = vpack.c.b16 %v185, %v181
    %v226 = vpack.c.b16 %v186, %v182
    %v227 = vpack.c.b16 %v191, %v187
    %v228 = vpack.c.b16 %v192, %v188
    %v229 = vpack.c.b16 %v193, %v189
    %v230 = vpack.c.b16 %v194, %v190
    %v231 = vpack.c.b16 %v199, %v195
    %v232 = vpack.c.b16 %v200, %v196
    %v233 = vpack.c.b16 %v201, %v197
    %v234 = vpack.c.b16 %v202, %v198
    %267 = vmatprep.subr.bf16.mxu0 %v204
    %268 = vmatpush1.bf16.msra.mxu0 %v203
    %269 = vmatprep.subr.bf16.mxu0 %v208
    %270 = vmatpush1.bf16.msra.mxu0 %v207
    %271 = vmatprep.subr.bf16.mxu0 %v212
    %272 = vmatpush1.bf16.msra.mxu0 %v211
    %273 = vmatprep.subr.bf16.mxu0 %v216
    %274 = vmatpush1.bf16.msra.mxu0 %v215
    %275 = vmatprep.subr.bf16.mxu0 %v220
    %276 = vmatpush1.bf16.msra.mxu0 %v219
    %277 = vmatprep.subr.bf16.mxu0 %v224
    %278 = vmatpush1.bf16.msra.mxu0 %v223
    %279 = vmatprep.subr.bf16.mxu0 %v228
    %280 = vmatpush1.bf16.msra.mxu0 %v227
    %281 = vmatprep.subr.bf16.mxu0 %v232
    %282 = vmatpush1.bf16.msra.mxu0 %v231
    %283 = vmatprep.subr.bf16.mxu0 0
    %284 = vmatpush1.bf16.msra.mxu0 0
    %285 = vmatprep.subr.bf16.mxu0 0
    %286 = vmatpush1.bf16.msra.mxu0 0
    %287 = vmatprep.subr.bf16.mxu0 0
    %288 = vmatpush1.bf16.msra.mxu0 0
    %289 = vmatprep.subr.bf16.mxu0 0
    %290 = vmatpush1.bf16.msra.mxu0 0
    %291 = vmatprep.subr.bf16.mxu0 0
    %292 = vmatpush1.bf16.msra.mxu0 0
    %293 = vmatprep.subr.bf16.mxu0 0
    %294 = vmatpush1.bf16.msra.mxu0 0
    %295 = vmatprep.subr.bf16.mxu0 0
    %296 = vmatpush1.bf16.msra.mxu0 0
    %297 = vmatprep.subr.bf16.mxu0 0
    %298 = vmatpush1.bf16.msra.mxu0 0
    %299 = vmatprep.mubr.bf16.mxu0 0
    %300 = vmatmul.mubr.bf16.gmra.mrb[0].mxu0 %v74
    %v301 = vpop.f32.mrb[0].mxu0
    %v302 = vadd.f32 0.0, %v301
    %v303 = vpop.f32.mrb[0].mxu0
    %v304 = vadd.f32 0.0, %v303
    %v305 = vpop.f32.mrb[0].mxu0
    %v306 = vadd.f32 0.0, %v305
    %v307 = vpop.f32.mrb[0].mxu0
    %v308 = vadd.f32 0.0, %v307
    %309 = vdwg.mxu0
    %310 = vmatprep.subr.bf16.mxu0 %v206
    %311 = vmatpush1.bf16.msra.mxu0 %v205
    %312 = vmatprep.subr.bf16.mxu0 %v210
    %313 = vmatpush1.bf16.msra.mxu0 %v209
    %314 = vmatprep.subr.bf16.mxu0 %v214
    %315 = vmatpush1.bf16.msra.mxu0 %v213
    %316 = vmatprep.subr.bf16.mxu0 %v218
    %317 = vmatpush1.bf16.msra.mxu0 %v217
    %318 = vmatprep.subr.bf16.mxu0 %v222
    %319 = vmatpush1.bf16.msra.mxu0 %v221
    %320 = vmatprep.subr.bf16.mxu0 %v226
    %321 = vmatpush1.bf16.msra.mxu0 %v225
    %322 = vmatprep.subr.bf16.mxu0 %v230
    %323 = vmatpush1.bf16.msra.mxu0 %v229
    %324 = vmatprep.subr.bf16.mxu0 %v234
    %325 = vmatpush1.bf16.msra.mxu0 %v233
    %326 = vmatprep.subr.bf16.mxu0 0
    %327 = vmatpush1.bf16.msra.mxu0 0
    %328 = vmatprep.subr.bf16.mxu0 0
    %329 = vmatpush1.bf16.msra.mxu0 0
    %330 = vmatprep.subr.bf16.mxu0 0
    %331 = vmatpush1.bf16.msra.mxu0 0
    %332 = vmatprep.subr.bf16.mxu0 0
    %333 = vmatpush1.bf16.msra.mxu0 0
    %334 = vmatprep.subr.bf16.mxu0 0
    %335 = vmatpush1.bf16.msra.mxu0 0
    %336 = vmatprep.subr.bf16.mxu0 0
    %337 = vmatpush1.bf16.msra.mxu0 0
    %338 = vmatprep.subr.bf16.mxu0 0
    %339 = vmatpush1.bf16.msra.mxu0 0
    %340 = vmatprep.subr.bf16.mxu0 0
    %341 = vmatpush1.bf16.msra.mxu0 0
    %342 = vmatprep.mubr.bf16.mxu0 0
    %343 = vmatmul.mubr.bf16.gmra.mrb[0].mxu0 %v74
    %v344 = vpop.f32.mrb[0].mxu0
    %v345 = vadd.f32 0.0, %v344
    %v346 = vpop.f32.mrb[0].mxu0
    %v347 = vadd.f32 0.0, %v346
    %v348 = vpop.f32.mrb[0].mxu0
    %v349 = vadd.f32 0.0, %v348
    %v350 = vpop.f32.mrb[0].mxu0
    %v351 = vadd.f32 0.0, %v350
    %352 = vdwg.mxu0
    %v353 = vxor.u32 %v302, 2147483648
    %v354 = vxor.u32 %v304, 2147483648
    %v355 = vxor.u32 %v306, 2147483648
    %v356 = vxor.u32 %v308, 2147483648
    %v357 = vmul.f32 %v353, 1.442695
    %v358 = vpow.pop %v357
    %v359 = vmul.f32 %v354, 1.442695
    %v360 = vpow.pop %v359
    %v361 = vmul.f32 %v355, 1.442695
    %v362 = vpow.pop %v361
    %v363 = vmul.f32 %v356, 1.442695
    %v364 = vpow.pop %v363
    %v365 = vadd.f32 %v358, 1.0
    %v366 = vadd.f32 %v360, 1.0
    %v367 = vadd.f32 %v362, 1.0
    %v368 = vadd.f32 %v364, 1.0
    %v369 = vrcp.pop %v365
    %v370 = vmul.f32 1.0, %v369
    %v371 = vrcp.pop %v366
    %v372 = vmul.f32 1.0, %v371
    %v373 = vrcp.pop %v367
    %v374 = vmul.f32 1.0, %v373
    %v375 = vrcp.pop %v368
    %v376 = vmul.f32 1.0, %v375
    %v377 = vmul.f32 %v302, %v370
    %v378 = vmul.f32 %v304, %v372
    %v379 = vmul.f32 %v306, %v374
    %v380 = vmul.f32 %v308, %v376
    %v381 = vmul.f32 %v377, %v345
    %v382 = vmul.f32 %v378, %v347
    %v383 = vmul.f32 %v379, %v349
    %v384 = vmul.f32 %v380, %v351
    %v385 = vpack.c.bf16 %v383, %v381
    %v386 = vpack.c.bf16 %v384, %v382
    %v387 = vld [vmem:[#allocation7] sm:$0xf]
    %v388 = vld [vmem:[#allocation7 + $0x4] sm:$0xf]
    %v389 = vld [vmem:[#allocation7 + $0x8] sm:$0xf]
    %v390 = vld [vmem:[#allocation7 + $0xc] sm:$0xf]
    %v391 = vld [vmem:[#allocation7 + $0x10] sm:$0xf]
    %v392 = vld [vmem:[#allocation7 + $0x14] sm:$0xf]
    %v393 = vld [vmem:[#allocation7 + $0x18] sm:$0xf]
    %v394 = vld [vmem:[#allocation7 + $0x1c] sm:$0xf]
    %v395 = vld [vmem:[#allocation7 + $0x20] sm:$0xf]
    %v396 = vld [vmem:[#allocation7 + $0x24] sm:$0xf]
    %v397 = vld [vmem:[#allocation7 + $0x28] sm:$0xf]
    %v398 = vld [vmem:[#allocation7 + $0x2c] sm:$0xf]
    %v399 = vld [vmem:[#allocation7 + $0x30] sm:$0xf]
    %v400 = vld [vmem:[#allocation7 + $0x34] sm:$0xf]
    %v401 = vld [vmem:[#allocation7 + $0x38] sm:$0xf]
    %v402 = vld [vmem:[#allocation7 + $0x3c] sm:$0xf]
    %v403 = vld [vmem:[#allocation7 + $0x40] sm:$0xf]
    %v404 = vld [vmem:[#allocation7 + $0x44] sm:$0xf]
    %v405 = vld [vmem:[#allocation7 + $0x48] sm:$0xf]
    %v406 = vld [vmem:[#allocation7 + $0x4c] sm:$0xf]
    %v407 = vld [vmem:[#allocation7 + $0x50] sm:$0xf]
    %v408 = vld [vmem:[#allocation7 + $0x54] sm:$0xf]
    %v409 = vld [vmem:[#allocation7 + $0x58] sm:$0xf]
    %v410 = vld [vmem:[#allocation7 + $0x5c] sm:$0xf]
    %v411 = vld [vmem:[#allocation7 + $0x60] sm:$0xf]
    %v412 = vld [vmem:[#allocation7 + $0x64] sm:$0xf]
    %v413 = vld [vmem:[#allocation7 + $0x68] sm:$0xf]
    %v414 = vld [vmem:[#allocation7 + $0x6c] sm:$0xf]
    %v415 = vld [vmem:[#allocation7 + $0x70] sm:$0xf]
    %v416 = vld [vmem:[#allocation7 + $0x74] sm:$0xf]
    %v417 = vld [vmem:[#allocation7 + $0x78] sm:$0xf]
    %v418 = vld [vmem:[#allocation7 + $0x7c] sm:$0xf]
    %v451 = vunpack.c.l.b16 %v387
    %v452 = vunpack.c.l.b16 %v388
    %v453 = vunpack.c.l.b16 %v389
    %v454 = vunpack.c.l.b16 %v390
    %v455 = vunpack.c.l.b16 %v391
    %v456 = vunpack.c.l.b16 %v392
    %v457 = vunpack.c.l.b16 %v393
    %v458 = vunpack.c.l.b16 %v394
    %v459 = vunpack.c.l.b16 %v395
    %v460 = vunpack.c.l.b16 %v396
    %v461 = vunpack.c.l.b16 %v397
    %v462 = vunpack.c.l.b16 %v398
    %v463 = vunpack.c.l.b16 %v399
    %v464 = vunpack.c.l.b16 %v400
    %v465 = vunpack.c.l.b16 %v401
    %v466 = vunpack.c.l.b16 %v402
    %v467 = vunpack.c.l.b16 %v403
    %v468 = vunpack.c.l.b16 %v404
    %v469 = vunpack.c.l.b16 %v405
    %v470 = vunpack.c.l.b16 %v406
    %v471 = vunpack.c.l.b16 %v407
    %v472 = vunpack.c.l.b16 %v408
    %v473 = vunpack.c.l.b16 %v409
    %v474 = vunpack.c.l.b16 %v410
    %v475 = vunpack.c.l.b16 %v411
    %v476 = vunpack.c.l.b16 %v412
    %v477 = vunpack.c.l.b16 %v413
    %v478 = vunpack.c.l.b16 %v414
    %v479 = vunpack.c.l.b16 %v415
    %v480 = vunpack.c.l.b16 %v416
    %v481 = vunpack.c.l.b16 %v417
    %v482 = vunpack.c.l.b16 %v418
    %v483 = vpack.c.b16 %v452, %v451
    %v484 = vpack.c.b16 %v454, %v453
    %v485 = vpack.c.b16 %v456, %v455
    %v486 = vpack.c.b16 %v458, %v457
    %v487 = vpack.c.b16 %v460, %v459
    %v488 = vpack.c.b16 %v462, %v461
    %v489 = vpack.c.b16 %v464, %v463
    %v490 = vpack.c.b16 %v466, %v465
    %v491 = vpack.c.b16 %v468, %v467
    %v492 = vpack.c.b16 %v470, %v469
    %v493 = vpack.c.b16 %v472, %v471
    %v494 = vpack.c.b16 %v474, %v473
    %v495 = vpack.c.b16 %v476, %v475
    %v496 = vpack.c.b16 %v478, %v477
    %v497 = vpack.c.b16 %v480, %v479
    %v498 = vpack.c.b16 %v482, %v481
    %515 = vmatprep.subr.bf16.mxu0 0
    %516 = vmatpush1.bf16.msra.mxu0 %v483
    %517 = vmatprep.subr.bf16.mxu0 0
    %518 = vmatpush1.bf16.msra.mxu0 %v484
    %519 = vmatprep.subr.bf16.mxu0 0
    %520 = vmatpush1.bf16.msra.mxu0 %v485
    %521 = vmatprep.subr.bf16.mxu0 0
    %522 = vmatpush1.bf16.msra.mxu0 %v486
    %523 = vmatprep.subr.bf16.mxu0 0
    %524 = vmatpush1.bf16.msra.mxu0 %v487
    %525 = vmatprep.subr.bf16.mxu0 0
    %526 = vmatpush1.bf16.msra.mxu0 %v488
    %527 = vmatprep.subr.bf16.mxu0 0
    %528 = vmatpush1.bf16.msra.mxu0 %v489
    %529 = vmatprep.subr.bf16.mxu0 0
    %530 = vmatpush1.bf16.msra.mxu0 %v490
    %531 = vmatprep.subr.bf16.mxu0 0
    %532 = vmatpush1.bf16.msra.mxu0 %v491
    %533 = vmatprep.subr.bf16.mxu0 0
    %534 = vmatpush1.bf16.msra.mxu0 %v492
    %535 = vmatprep.subr.bf16.mxu0 0
    %536 = vmatpush1.bf16.msra.mxu0 %v493
    %537 = vmatprep.subr.bf16.mxu0 0
    %538 = vmatpush1.bf16.msra.mxu0 %v494
    %539 = vmatprep.subr.bf16.mxu0 0
    %540 = vmatpush1.bf16.msra.mxu0 %v495
    %541 = vmatprep.subr.bf16.mxu0 0
    %542 = vmatpush1.bf16.msra.mxu0 %v496
    %543 = vmatprep.subr.bf16.mxu0 0
    %544 = vmatpush1.bf16.msra.mxu0 %v497
    %545 = vmatprep.subr.bf16.mxu0 0
    %546 = vmatpush1.bf16.msra.mxu0 %v498
    %547 = vmatprep.mubr.bf16.mxu0 %v386
    %548 = vmatmul.mubr.bf16.gmra.mrb[0].mxu0 %v385
    %v549 = vpop.f32.mrb[0].mxu0
    %v550 = vadd.f32 0.0, %v549
    %v551 = vpop.f32.mrb[0].mxu0
    %v552 = vpop.f32.mrb[0].mxu0
    %v553 = vadd.f32 0.0, %v552
    %v554 = vpop.f32.mrb[0].mxu0
    %555 = vdwg.mxu0
    %556 = vst [vmem:[#allocation8] sm:$0xff] %v550
    %557 = vst [vmem:[#allocation8 + $0x8] sm:$0xff] %v553
    // Predicated region
    $region26: #{tpu_custom_call.1} parent=1 // pred_check
      _
    $region27: #{tpu_custom_call.1} parent=1 // pred_check_branch
      %559 = sbr.rel (0) target = $region29
    $region28: #{tpu_custom_call.1} parent=1 // pred_region
      %s561 = ssub.s32 256, 256
      %562 = vsyncadd [#allocation4], %s561
      %s563 = sshll.u32 [#allocation8], 4
      %s564 = int_to_ptr.vmem [resolvable:$true] %s563
      %569 = dma.vmem_to_hbm [thread:$0]  %s564, 256, %s3, [#allocation4], 128, 128, 8
    $region29: #{tpu_custom_call.1} parent=1 // pred_fallthru
      _
    // Predicated region
    $region30: #{tpu_custom_call.1} parent=1 // pred_check
      _
    $region31: #{tpu_custom_call.1} parent=1 // pred_check_branch
      %571 = sbr.rel (0) target = $region33
    $region32: #{tpu_custom_call.1} parent=1 // pred_region
      %572 = dma.done [#allocation4], 256
    $region33: #{tpu_custom_call.1} parent=1 // pred_fallthru
      _
    %573 = vsyncpa [#allocation3], 1
    %574 = vsyncpa [#allocation6], 1
    %575 = vsyncpa [#allocation4], 1

</llo_original>
